<compile_context>
chip_gen: v6e
topology: v6e:2x2x1
jax: 0.10.0
libtpu: 0.0.40
codegen_flags: <defaults>
</compile_context>

<pallas_src>
import jax
import jax.numpy as jnp
from jax.experimental import pallas as pl
from jax.experimental.pallas import tpu as pltpu


def _adaptive_layer_kernel(gamma_ref, beta_ref, x_ref, o_ref):
    # gamma_ref / beta_ref: (Bt, C, 1)       per-batch modulation (broadcasts on lanes)
    # x_ref / o_ref:        (Bt, C, tile_hw) lane-dense feature tile
    g = gamma_ref[...]
    b = beta_ref[...]
    x = x_ref[...].astype(g.dtype)
    o_ref[...] = (g * x + b).astype(o_ref.dtype)


def _vmem_capacity_bytes():
    try:
        return int(pltpu.get_tpu_info().vmem_capacity_bytes)
    except Exception:
        return 64 << 20  # conservative fallback (v7x-sized)


def _block_plan(B, C, HW, itemsize, vmem_cap):
    """Pick (batch_block, spatial_tile).

    Budget is ~cap/10 per block (so 4x double-buffered in+out stays well under
    ~40% of VMEM capacity), capped at 6 MiB which is already near HBM roofline
    on every generation.
    """
    budget = max(1 << 20, min(6 << 20, vmem_cap // 10))
    row_bytes = max(1, C * HW * itemsize)

    if row_bytes <= budget:
        # Small feature map: full spatial extent, pack batch elements per step.
        bt = max(1, min(B, budget // row_bytes))
        return bt, HW

    # Large feature map: one batch element per step, tile the spatial axis in
    # 128-lane multiples (ragged last block is masked by Pallas).
    if HW <= 128:
        return 1, HW
    max_lanes = max(128, (budget // (C * itemsize)) // 128 * 128)
    tile_hw = min(max_lanes, (HW // 128) * 128)
    return 1, tile_hw


def adaptive_layer_pallas(x, style, weight, bias, *, block_plan=None):
    """AdaptiveLayer forward.

    x:      (B, C, H, W)      input feature map
    style:  (B, style_dim)
    weight: (2*C, style_dim)  nn.Linear weight (PyTorch layout)
    bias:   (2*C,)            nn.Linear bias
    """
    B, C, H, W = x.shape
    HW = H * W
    style_dim = style.shape[1]
    assert weight.shape == (2 * C, style_dim)
    assert bias.shape == (2 * C,)

    # Tiny style projection in XLA (microseconds, off the critical path).
    gb = (style.astype(jnp.float32) @ weight.astype(jnp.float32).T
          + bias.astype(jnp.float32))                      # (B, 2C)
    compute_dtype = jnp.bfloat16 if x.dtype == jnp.bfloat16 else jnp.float32
    gamma = gb[:, :C].reshape(B, C, 1).astype(compute_dtype)
    beta = gb[:, C:].reshape(B, C, 1).astype(compute_dtype)

    x3 = x.reshape(B, C, HW)  # contiguous view: spatial axis on lanes

    vmem_cap = _vmem_capacity_bytes()
    if block_plan is None:
        bt, tile_hw = _block_plan(B, C, HW, x.dtype.itemsize, vmem_cap)
    else:
        bt, tile_hw = block_plan

    grid = (pl.cdiv(B, bt), pl.cdiv(HW, tile_hw))

    block_bytes = bt * C * tile_hw * x.dtype.itemsize
    # Double-buffered input + output blocks, plus slack for gamma/beta and misc.
    vmem_limit = int(min(vmem_cap // 2, max(4 * block_bytes + (2 << 20), 16 << 20)))

    out3 = pl.pallas_call(
        _adaptive_layer_kernel,
        out_shape=jax.ShapeDtypeStruct((B, C, HW), x.dtype),
        grid=grid,
        in_specs=[
            pl.BlockSpec((bt, C, 1), lambda b, s: (b, 0, 0)),        # gamma
            pl.BlockSpec((bt, C, 1), lambda b, s: (b, 0, 0)),        # beta
            pl.BlockSpec((bt, C, tile_hw), lambda b, s: (b, 0, s)),  # x tile
        ],
        out_specs=pl.BlockSpec((bt, C, tile_hw), lambda b, s: (b, 0, s)),
        compiler_params=pltpu.CompilerParams(
            dimension_semantics=("parallel", "parallel"),
            vmem_limit_bytes=vmem_limit),
    )(gamma, beta, x3)

    return out3.reshape(B, C, H, W)


def adaptive_layer_ref(x, style, weight, bias):
    """Pure-JAX reference mirroring the PyTorch forward."""
    gb = style.astype(jnp.float32) @ weight.astype(jnp.float32).T + bias
    C = x.shape[1]
    gamma = gb[:, :C][:, :, None, None]
    beta = gb[:, C:][:, :, None, None]
    return (gamma * x.astype(jnp.float32) + beta).astype(x.dtype)


if __name__ == "__main__":
    key = jax.random.PRNGKey(0)

    # --- Case 1: small shapes (exercises the batch-blocking path) ---------------
    B, C, H, W, style_dim = 2, 8, 16, 16, 32
    kx, ks, kw, key = jax.random.split(key, 4)

    x = jax.random.normal(kx, (B, C, H, W), dtype=jnp.float32)
    style = jax.random.normal(ks, (B, style_dim), dtype=jnp.float32)

    # nn.Linear(style_dim, 2*C) with the module's bias init:
    # first C entries = 1 (gamma), last C entries = 0 (beta).
    lim = 1.0 / jnp.sqrt(jnp.float32(style_dim))
    weight = jax.random.uniform(kw, (2 * C, style_dim), jnp.float32, -lim, lim)
    bias = jnp.concatenate([jnp.ones((C,), jnp.float32),
                            jnp.zeros((C,), jnp.float32)])

    out = adaptive_layer_pallas(x, style, weight, bias)
    out = jax.block_until_ready(out)
    ref = adaptive_layer_ref(x, style, weight, bias)
    assert out.shape == (B, C, H, W)
    assert jnp.allclose(out, ref, atol=1e-5, rtol=1e-5), "mismatch vs reference (case 1)"

    # --- Case 2: non-128-divisible spatial extent with a forced small tile ------
    # (exercises the spatial-tiling path with a masked ragged last block)
    B2, C2, H2, W2 = 1, 8, 16, 20   # HW = 320 -> tiles of 128, last block masked
    kx2, ks2, key = jax.random.split(key, 3)
    x2 = jax.random.normal(kx2, (B2, C2, H2, W2), dtype=jnp.float32)
    style2 = jax.random.normal(ks2, (B2, style_dim), dtype=jnp.float32)
    weight2 = weight[: 2 * C2, :]
    bias2 = jnp.concatenate([jnp.ones((C2,), jnp.float32),
                             jnp.zeros((C2,), jnp.float32)])

    out2 = adaptive_layer_pallas(x2, style2, weight2, bias2, block_plan=(1, 128))
    out2 = jax.block_until_ready(out2)
    ref2 = adaptive_layer_ref(x2, style2, weight2, bias2)
    assert jnp.allclose(out2, ref2, atol=1e-5, rtol=1e-5), "mismatch vs reference (case 2)"

    print("KERNEL_OK")
</pallas_src>

<mosaic_0001>
module attributes {stable_mosaic.version = 11 : i64} {
  func.func @_adaptive_layer_kernel(%arg0: i32, %arg1: i32, %arg2: memref<2x8x1xf32, #tpu.memory_space<vmem>>, %arg3: memref<2x8x1xf32, #tpu.memory_space<vmem>>, %arg4: memref<2x8x256xf32, #tpu.memory_space<vmem>>, %arg5: memref<2x8x256xf32, #tpu.memory_space<vmem>>) attributes {dimension_semantics = [#tpu.dimension_semantics<parallel>, #tpu.dimension_semantics<parallel>], iteration_bounds = array<i64: 1, 1>, scalar_prefetch = 0 : i64, scratch_operands = 0 : i64, tpu.core_type = #tpu.core_type<tc>, window_params = [{transform_indices = @transform_0, window_bounds = array<i64: 2, 8, 1>}, {transform_indices = @transform_1, window_bounds = array<i64: 2, 8, 1>}, {transform_indices = @transform_2, window_bounds = array<i64: 2, 8, 256>}, {transform_indices = @transform_3, window_bounds = array<i64: 2, 8, 256>}]} {
    %c0 = arith.constant 0 : index
    %c0_0 = arith.constant 0 : index
    %c0_1 = arith.constant 0 : index
    %0 = vector.load %arg2[%c0, %c0_0, %c0_1] : memref<2x8x1xf32, #tpu.memory_space<vmem>>, vector<2x8x1xf32>
    %c0_2 = arith.constant 0 : index
    %c0_3 = arith.constant 0 : index
    %c0_4 = arith.constant 0 : index
    %1 = vector.load %arg3[%c0_2, %c0_3, %c0_4] : memref<2x8x1xf32, #tpu.memory_space<vmem>>, vector<2x8x1xf32>
    %c0_5 = arith.constant 0 : index
    %c0_6 = arith.constant 0 : index
    %c0_7 = arith.constant 0 : index
    %2 = vector.load %arg4[%c0_5, %c0_6, %c0_7] : memref<2x8x256xf32, #tpu.memory_space<vmem>>, vector<2x8x256xf32>
    %3 = vector.broadcast %0 : vector<2x8x1xf32> to vector<2x8x256xf32>
    %4 = arith.mulf %3, %2 : vector<2x8x256xf32>
    %5 = vector.broadcast %1 : vector<2x8x1xf32> to vector<2x8x256xf32>
    %6 = arith.addf %4, %5 : vector<2x8x256xf32>
    %c0_8 = arith.constant 0 : index
    %c0_9 = arith.constant 0 : index
    %c0_10 = arith.constant 0 : index
    %7 = vector.load %arg5[%c0_8, %c0_9, %c0_10] : memref<2x8x256xf32, #tpu.memory_space<vmem>>, vector<2x8x256xf32>
    tpu.vector_store %arg5[%c0_8, %c0_9, %c0_10], %6 {strides = array<i32>} : memref<2x8x256xf32, #tpu.memory_space<vmem>>, vector<2x8x256xf32>,
    return
  }
  func.func @transform_0(%arg0: i32, %arg1: i32) -> (i32, i32, i32) {
    %c0_i32 = arith.constant 0 : i32
    %c0_i32_0 = arith.constant 0 : i32
    %c0_i32_1 = arith.constant 0 : i32
    return %arg0, %c0_i32, %c0_i32_0 : i32, i32, i32
  }
  func.func @transform_1(%arg0: i32, %arg1: i32) -> (i32, i32, i32) {
    %c0_i32 = arith.constant 0 : i32
    %c0_i32_0 = arith.constant 0 : i32
    %c0_i32_1 = arith.constant 0 : i32
    return %arg0, %c0_i32, %c0_i32_0 : i32, i32, i32
  }
  func.func @transform_2(%arg0: i32, %arg1: i32) -> (i32, i32, i32) {
    %c0_i32 = arith.constant 0 : i32
    %c0_i32_0 = arith.constant 0 : i32
    return %arg0, %c0_i32, %arg1 : i32, i32, i32
  }
  func.func @transform_3(%arg0: i32, %arg1: i32) -> (i32, i32, i32) {
    %c0_i32 = arith.constant 0 : i32
    %c0_i32_0 = arith.constant 0 : i32
    return %arg0, %c0_i32, %arg1 : i32, i32, i32
  }
}

</mosaic_0001>

<llo_original>
// kernel: tpu_custom_call.1
$region0: #{tpu_custom_call.1}
  #allocation0 [shape = 'u32[]', space=smem, size = 0x4, offset = 0x4, fixed_abs, tag = 'smem constant byte address 0x4 - core index']
  #allocation1 [shape = 'u32[144,128]{1,0:T(1,128)}', space=vmem, size = 0x12000, scoped, tag = 'internal scratch']
  %s0 = inlined_call_operand.vmem [shape: f32[2,8,1], index: 0, kind: input, shape index: {}]
  %s1 = inlined_call_operand.vmem [shape: f32[2,8,1], index: 1, kind: input, shape index: {}]
  %s2 = inlined_call_operand.vmem [shape: f32[2,8,256], index: 2, kind: input, shape index: {}]
  %s3 = inlined_call_operand.hbm [shape: f32[2,8,256], index: 3, kind: output, shape index: {}]
  %s4 = sld [smem:[#allocation0]]
  $region22: #{tpu_custom_call.1} parent=0
    _
  %s6 = ssub.s32 1, %s4
  %s7 = scalar_select 0, %s6, %s4
  $region1: #{tpu_custom_call.1} parent=0
    #allocation2 [shape = 'u8[16384]{0}', space=vmem, size = 0x4000, scoped, tag = 'output window, operand 0, single buffered']
    #allocation3 [shape = 's32[1]{0}', space=sflag, size = 0x4, scoped, tag = 'scoped memory for tpu_custom_call.1']
    %8 = vsyncpa [#allocation3], 0
    // Predicated region
    $region2: #{tpu_custom_call.1} parent=1 // pred_check
      _
    $region3: #{tpu_custom_call.1} parent=1 // pred_check_branch
      %10 = sbr.rel (0) target = $region5
    $region4: #{tpu_custom_call.1} parent=1 // pred_region
      _
    $region5: #{tpu_custom_call.1} parent=1 // pred_fallthru
      _
    // Predicated region
    $region6: #{tpu_custom_call.1} parent=1 // pred_check
      _
    $region7: #{tpu_custom_call.1} parent=1 // pred_check_branch
      %12 = sbr.rel (0) target = $region9
    $region8: #{tpu_custom_call.1} parent=1 // pred_region
      _
    $region9: #{tpu_custom_call.1} parent=1 // pred_fallthru
      _
    // Predicated region
    $region10: #{tpu_custom_call.1} parent=1 // pred_check
      _
    $region11: #{tpu_custom_call.1} parent=1 // pred_check_branch
      %14 = sbr.rel (0) target = $region13
    $region12: #{tpu_custom_call.1} parent=1 // pred_region
      _
    $region13: #{tpu_custom_call.1} parent=1 // pred_fallthru
      _
    %v15 = vld [vmem:[%s0] sm:$0xff]
    %v16 = vld [vmem:[%s0 + $0x8] sm:$0xff]
    %v17 = vld [vmem:[%s1] sm:$0xff]
    %v18 = vld [vmem:[%s1 + $0x8] sm:$0xff]
    %v19 = vld [vmem:[%s2] sm:$0xff]
    %v20 = vld [vmem:[%s2 + $0x8] sm:$0xff]
    %v21 = vld [vmem:[%s2 + $0x10] sm:$0xff]
    %v22 = vld [vmem:[%s2 + $0x18] sm:$0xff]
    %24 = vset.pattern.permute.xlu0 0
    %25 = vperm.xlu0 %24, %v15
    %v26 = vpop.permute.xlu0 %25
    %29 = vset.pattern.permute.xlu0 0
    %30 = vperm.xlu0 %29, %v16
    %v31 = vpop.permute.xlu0 %30
    %v33 = vmul.f32 %v26, %v19
    %v34 = vmul.f32 %v26, %v20
    %v35 = vmul.f32 %v31, %v21
    %v36 = vmul.f32 %v31, %v22
    %38 = vset.pattern.permute.xlu0 0
    %39 = vperm.xlu0 %38, %v17
    %v40 = vpop.permute.xlu0 %39
    %43 = vset.pattern.permute.xlu0 0
    %44 = vperm.xlu0 %43, %v18
    %v45 = vpop.permute.xlu0 %44
    %v47 = vadd.f32 %v33, %v40
    %v48 = vadd.f32 %v34, %v40
    %v49 = vadd.f32 %v35, %v45
    %v50 = vadd.f32 %v36, %v45
    %51 = vst [vmem:[#allocation2] sm:$0xff] %v47
    %52 = vst [vmem:[#allocation2 + $0x8] sm:$0xff] %v48
    %53 = vst [vmem:[#allocation2 + $0x10] sm:$0xff] %v49
    %54 = vst [vmem:[#allocation2 + $0x18] sm:$0xff] %v50
    // Predicated region
    $region14: #{tpu_custom_call.1} parent=1 // pred_check
      _
    $region15: #{tpu_custom_call.1} parent=1 // pred_check_branch
      %56 = sbr.rel (0) target = $region17
    $region16: #{tpu_custom_call.1} parent=1 // pred_region
      %s58 = ssub.s32 512, 512
      %59 = vsyncadd [#allocation3], %s58
      %s60 = sshll.u32 [#allocation2], 4
      %s61 = int_to_ptr.vmem [resolvable:$true] %s60
      %66 = dma.vmem_to_hbm [thread:$0]  %s61, 512, %s3, [#allocation3], 256, 256, 16
    $region17: #{tpu_custom_call.1} parent=1 // pred_fallthru
      _
    // Predicated region
    $region18: #{tpu_custom_call.1} parent=1 // pred_check
      _
    $region19: #{tpu_custom_call.1} parent=1 // pred_check_branch
      %68 = sbr.rel (0) target = $region21
    $region20: #{tpu_custom_call.1} parent=1 // pred_region
      %69 = dma.done [#allocation3], 512
    $region21: #{tpu_custom_call.1} parent=1 // pred_fallthru
      _
    %70 = vsyncpa [#allocation3], 1

</llo_original>
